<compile_context>
chip_gen: v5e
topology: v5e:2x2
jax: 0.10.0
libtpu: 0.0.40
codegen_flags: <defaults>
</compile_context>

<pallas_src>
import jax
import jax.numpy as jnp
from jax.experimental import pallas as pl
from jax.experimental.pallas import tpu as pltpu


# ---------------------------------------------------------------------------
# Kernels
# ---------------------------------------------------------------------------

def _glu_row_kernel(x_ref, o_ref):
    """x_ref: (TR, 2H) VMEM tile; o_ref: (TR, H) VMEM tile."""
    H = o_ref.shape[-1]
    cdt = jnp.bfloat16 if x_ref.dtype == jnp.bfloat16 else jnp.float32
    # Slice through the Ref view so only each half is materialized (free at a
    # lane-tile boundary when H % 128 == 0).
    out = x_ref[:, :H].astype(cdt)
    gate = x_ref[:, H:].astype(cdt)
    # sigmoid(g) == 0.5 * (tanh(0.5*g) + 1): 2 EUP ops/elem instead of 3.
    gate_sig = 0.5 * (jnp.tanh(0.5 * gate) + 1.0)
    o_ref[...] = (jnp.tanh(out) * gate_sig).astype(o_ref.dtype)


def _glu_split_kernel(out_ref, gate_ref, o_ref):
    """Two pre-split halves (TA, H, B); used when the gating dim is not last."""
    cdt = jnp.bfloat16 if out_ref.dtype == jnp.bfloat16 else jnp.float32
    out = out_ref[...].astype(cdt)
    gate = gate_ref[...].astype(cdt)
    gate_sig = 0.5 * (jnp.tanh(0.5 * gate) + 1.0)
    o_ref[...] = (jnp.tanh(out) * gate_sig).astype(o_ref.dtype)


# ---------------------------------------------------------------------------
# Tiling / VMEM helpers
# ---------------------------------------------------------------------------

_TARGET_BLOCK_BYTES = 4 * 1024 * 1024     # ~4 MiB input block (85%+ roofline)
_MAX_ROWS = 2048
_VMEM_CLAMP = 48 * 1024 * 1024            # stay well under v7x's 64 MiB VMEM


def _round_up(n, m):
    return -(-n // m) * m


def _pick_row_tile(n_rows, row_bytes):
    tr = max(8, min(_MAX_ROWS, _TARGET_BLOCK_BYTES // max(1, row_bytes)))
    tr = max(8, (tr // 8) * 8)
    # Guarantee >= 2 grid steps when possible so v7x's two TCs both get work.
    if n_rows > 8 and tr >= n_rows:
        tr = max(8, _round_up(-(-n_rows // 2), 8))
    return int(tr)


def _vmem_limit(working_set_bytes):
    return int(min(_VMEM_CLAMP, max(2 * working_set_bytes, 8 * 1024 * 1024)))


# ---------------------------------------------------------------------------
# Wrappers
# ---------------------------------------------------------------------------

def _glu_last_dim(x):
    lead = x.shape[:-1]
    D = x.shape[-1]
    H = D // 2
    N = 1
    for s in lead:
        N *= s
    x2 = x.reshape(N, D)

    itemsize = x2.dtype.itemsize
    TR = _pick_row_tile(N, D * itemsize)
    grid = (pl.cdiv(N, TR),)                       # ragged last block is fine
    working = 2 * (TR * D + TR * H) * itemsize     # double-buffered in + out

    y2 = pl.pallas_call(
        _glu_row_kernel,
        out_shape=jax.ShapeDtypeStruct((N, H), x.dtype),
        grid=grid,
        in_specs=[pl.BlockSpec((TR, D), lambda r: (r, 0))],
        out_specs=pl.BlockSpec((TR, H), lambda r: (r, 0)),
        compiler_params=pltpu.CompilerParams(
            dimension_semantics=("parallel",),
            vmem_limit_bytes=_vmem_limit(working),
        ),
    )(x2)
    return y2.reshape(*lead, H)


def _glu_middle_dim(x, dim):
    shape = x.shape
    D = shape[dim]
    H = D // 2
    A = 1
    for s in shape[:dim]:
        A *= s
    B = 1
    for s in shape[dim + 1:]:
        B *= s
    x3 = x.reshape(A, D, B)

    itemsize = x3.dtype.itemsize
    half_row_bytes = H * B * itemsize
    TA = max(1, min(_MAX_ROWS, _TARGET_BLOCK_BYTES // max(1, half_row_bytes)))
    if A > 1 and TA >= A:
        TA = -(-A // 2)                            # >= 2 grid steps for v7x
    TA = int(TA)
    grid = (pl.cdiv(A, TA),)
    working = 2 * 3 * TA * H * B * itemsize        # 2 inputs + 1 output, 2 bufs

    y3 = pl.pallas_call(
        _glu_split_kernel,
        out_shape=jax.ShapeDtypeStruct((A, H, B), x.dtype),
        grid=grid,
        in_specs=[
            pl.BlockSpec((TA, H, B), lambda a: (a, 0, 0)),   # "out" half
            pl.BlockSpec((TA, H, B), lambda a: (a, 1, 0)),   # "gate" half
        ],
        out_specs=pl.BlockSpec((TA, H, B), lambda a: (a, 0, 0)),
        compiler_params=pltpu.CompilerParams(
            dimension_semantics=("parallel",),
            vmem_limit_bytes=_vmem_limit(working),
        ),
    )(x3, x3)
    return y3.reshape(shape[:dim] + (H,) + shape[dim + 1:])


def gated_linear_unit(x, dim=-1):
    """GLU: chunk x in two along `dim`, return tanh(out) * sigmoid(gate)."""
    ndim = x.ndim
    dim = dim % ndim
    D = x.shape[dim]
    assert D % 2 == 0, "gating dim must be even for chunk(..., 2)"
    H = D // 2

    if dim == ndim - 1:
        return _glu_last_dim(x)

    # Non-last gating dim: avoid a full HBM transpose by splitting the halves
    # with two index maps on the untransposed (A, D, B) view.
    if H % 8 == 0:
        return _glu_middle_dim(x, dim)

    # TODO(synk): rare fallback (H not a multiple of 8) still pays two
    # full-array transposes; could be handled with element-offset index maps.
    xt = jnp.moveaxis(x, dim, -1)
    yt = _glu_last_dim(xt)
    return jnp.moveaxis(yt, -1, dim)


# ---------------------------------------------------------------------------
# Self-test
# ---------------------------------------------------------------------------

if __name__ == "__main__":
    key = jax.random.PRNGKey(0)
    k1, k2, k3 = jax.random.split(key, 3)

    def ref_glu(x, dim):
        out, gate = jnp.split(x, 2, axis=dim)
        return jnp.tanh(out) * jax.nn.sigmoid(gate)

    ok = True

    # 1) Common case: gating along the last dim (batch=2, seq=8, hidden=128).
    Bn, S, Hd = 2, 8, 128
    x1 = jax.random.normal(k1, (Bn, S, 2 * Hd), dtype=jnp.float32)
    y1 = jax.block_until_ready(gated_linear_unit(x1, dim=-1))
    ok &= (y1.shape == (Bn, S, Hd))
    ok &= bool(jnp.allclose(y1, ref_glu(x1, -1), atol=1e-5, rtol=1e-5))

    # 2) Ragged row count (exercises the non-divisible last grid block).
    x2 = jax.random.normal(k2, (3, 5, 256), dtype=jnp.float32)
    y2 = jax.block_until_ready(gated_linear_unit(x2, dim=-1))
    ok &= bool(jnp.allclose(y2, ref_glu(x2, -1), atol=1e-5, rtol=1e-5))

    # 3) Non-last gating dim (transpose-free two-stream path).
    x3 = jax.random.normal(k3, (2, 64, 16), dtype=jnp.float32)
    y3 = jax.block_until_ready(gated_linear_unit(x3, dim=1))
    ok &= bool(jnp.allclose(y3, ref_glu(x3, 1), atol=1e-5, rtol=1e-5))

    assert ok
    print("KERNEL_OK")
</pallas_src>

<mosaic_0001>
module attributes {stable_mosaic.version = 11 : i64} {
  func.func @_glu_row_kernel(%arg0: i32, %arg1: memref<8x256xf32, #tpu.memory_space<vmem>>, %arg2: memref<8x128xf32, #tpu.memory_space<vmem>>) attributes {dimension_semantics = [#tpu.dimension_semantics<parallel>], iteration_bounds = array<i64: 2>, scalar_prefetch = 0 : i64, scratch_operands = 0 : i64, tpu.core_type = #tpu.core_type<tc>, window_params = [{transform_indices = @transform_0, window_bounds = array<i64: 8, 256>}, {transform_indices = @transform_1, window_bounds = array<i64: 8, 128>}]} {
    %c0 = arith.constant 0 : index
    %c0_0 = arith.constant 0 : index
    %0 = vector.load %arg1[%c0, %c0_0] : memref<8x256xf32, #tpu.memory_space<vmem>>, vector<8x128xf32>
    %c0_1 = arith.constant 0 : index
    %c128 = arith.constant 128 : index
    %1 = vector.load %arg1[%c0_1, %c128] : memref<8x256xf32, #tpu.memory_space<vmem>>, vector<8x128xf32>
    %cst = arith.constant 5.000000e-01 : f32
    %2 = vector.broadcast %cst : f32 to vector<8x128xf32>
    %3 = arith.mulf %2, %1 : vector<8x128xf32>
    %4 = math.tanh %3 : vector<8x128xf32>
    %cst_2 = arith.constant 1.000000e+00 : f32
    %5 = vector.broadcast %cst_2 : f32 to vector<8x128xf32>
    %6 = arith.addf %4, %5 : vector<8x128xf32>
    %cst_3 = arith.constant 5.000000e-01 : f32
    %7 = vector.broadcast %cst_3 : f32 to vector<8x128xf32>
    %8 = arith.mulf %7, %6 : vector<8x128xf32>
    %9 = math.tanh %0 : vector<8x128xf32>
    %10 = arith.mulf %9, %8 : vector<8x128xf32>
    %c0_4 = arith.constant 0 : index
    %c0_5 = arith.constant 0 : index
    %11 = vector.load %arg2[%c0_4, %c0_5] : memref<8x128xf32, #tpu.memory_space<vmem>>, vector<8x128xf32>
    tpu.vector_store %arg2[%c0_4, %c0_5], %10 {strides = array<i32>} : memref<8x128xf32, #tpu.memory_space<vmem>>, vector<8x128xf32>,
    return
  }
  func.func @transform_0(%arg0: i32) -> (i32, i32) {
    %c0_i32 = arith.constant 0 : i32
    %c0_i32_0 = arith.constant 0 : i32
    return %arg0, %c0_i32 : i32, i32
  }
  func.func @transform_1(%arg0: i32) -> (i32, i32) {
    %c0_i32 = arith.constant 0 : i32
    %c0_i32_0 = arith.constant 0 : i32
    return %arg0, %c0_i32 : i32, i32
  }
}

</mosaic_0001>

<llo_original>
// kernel: tpu_custom_call.1
$region0: #{tpu_custom_call.1}
  #allocation0 [shape = 'u32[]', space=smem, size = 0x4, offset = 0x4, fixed_abs, tag = 'smem constant byte address 0x4 - core index']
  #allocation1 [shape = 'u32[72,128]{1,0:T(1,128)}', space=vmem, size = 0x9000, scoped, tag = 'internal scratch']
  %s0 = inlined_call_operand.hbm [shape: f32[16,256], index: 0, kind: input, shape index: {}]
  %s1 = inlined_call_operand.hbm [shape: f32[16,128], index: 1, kind: output, shape index: {}]
  %s2 = sld [smem:[#allocation0]]
  $region41: #{tpu_custom_call.1} parent=0
    _
  %s4 = ssub.s32 1, %s2
  %s5 = scalar_select 0, %s4, %s2
  $region1: #{tpu_custom_call.1} parent=0
    #allocation2 [shape = 'u8[16384]{0}', space=vmem, size = 0x4000, scoped, tag = 'input window, operand 0']
    #allocation3 [shape = 's32[2]{0}', space=sflag, size = 0x8, scoped, tag = 'scoped memory for tpu_custom_call.1']
    #allocation4 [shape = 's32[2]{0}', space=sflag, size = 0x8, scoped, tag = 'scoped memory for tpu_custom_call.1']
    #allocation5 [shape = 'u8[8192]{0}', space=vmem, size = 0x2000, scoped, tag = 'output window, operand 0']
    %6 = vsyncpa [#allocation3], 0
    %s7 = scalar_lea.sflag [#allocation3], 1
    %8 = vsyncpa %s7, 0
    %9 = vsyncpa [#allocation4], 0
    %s10 = scalar_lea.sflag [#allocation4], 1
    %11 = vsyncpa %s10, 0
    loop: start=0, step=1, limit=4
    $region2: #{tpu_custom_call.1} parent=1 // loop_pre_header
      _
    $region3: #{tpu_custom_call.1} parent=1 // loop_header
      %s13 = sphi 0, %s17
      %p14 = scmp.ge.s32.totalorder %s13, 4
      %s23 = sphi 0, %s25
      %s26 = sphi 0, %s23
      %s27 = sphi 0, %s26
      %s43 = sphi 0, %s27
      %s49 = sphi 0, %s51
      %s52 = sphi 0, %s49
      %s53 = sphi 0, %s52
      %s69 = sphi 0, %s53
    $region4: #{tpu_custom_call.1} parent=1 // loop_header_branch
      %16 = sbr.rel (%p14) target = $region8
    $region5: #{tpu_custom_call.1} parent=1 // loop_body
      %s18 = ssub.s32 %s13, 1
      %s19 = ssub.s32 %s13, 2
      %s20 = sadd.s32 %s13, 1
      %s21 = ssub.s32 %s13, %s20
      %p22 = scmp.eq.s32.totalorder %s21, 0
      %s24 = sadd.s32 %s23, 1
      %s25 = scalar_select %p22, %s23, %s24
      %p28 = pneg %p22
      %p29 = scmp.eq.s32.totalorder %s13, 1
      %p30 = por %p28, %p29
      %p31 = scmp.ne.s32.totalorder %s23, %s26
      %p32 = scmp.eq.s32.totalorder %s13, 0
      %p33 = por %p31, %p32
      %p34 = scmp.ne.s32.totalorder %s23, %s26
      %p35 = scmp.eq.s32.totalorder %s18, 1
      %p36 = por %p34, %p35
      %p37 = scmp.ne.s32.totalorder %s26, %s27
      %p38 = scmp.eq.s32.totalorder %s18, 0
      %p39 = por %p37, %p38
      %p40 = scmp.ne.s32.totalorder %s26, %s27
      %p41 = scmp.eq.s32.totalorder %s19, 1
      %p42 = por %p40, %p41
      %p44 = scmp.ne.s32.totalorder %s27, %s43
      %p45 = scmp.eq.s32.totalorder %s19, 0
      %p46 = por %p44, %p45
      %s47 = ssub.s32 %s13, %s20
      %p48 = scmp.eq.s32.totalorder %s47, 0
      %s50 = sadd.s32 %s49, 1
      %s51 = scalar_select %p48, %s49, %s50
      %p54 = pneg %p48
      %p55 = scmp.eq.s32.totalorder %s13, 1
      %p56 = por %p54, %p55
      %p57 = scmp.ne.s32.totalorder %s49, %s52
      %p58 = scmp.eq.s32.totalorder %s13, 0
      %p59 = por %p57, %p58
      %p60 = scmp.ne.s32.totalorder %s49, %s52
      %p61 = scmp.eq.s32.totalorder %s18, 1
      %p62 = por %p60, %p61
      %p63 = scmp.ne.s32.totalorder %s52, %s53
      %p64 = scmp.eq.s32.totalorder %s18, 0
      %p65 = por %p63, %p64
      %p66 = scmp.ne.s32.totalorder %s52, %s53
      %p67 = scmp.eq.s32.totalorder %s19, 1
      %p68 = por %p66, %p67
      %p70 = scmp.ne.s32.totalorder %s53, %s69
      %p71 = scmp.eq.s32.totalorder %s19, 0
      %p72 = por %p70, %p71
      %p73 = scmp.le.s32.totalorder 1, %s13
      %p74 = scmp.lt.s32.totalorder %s13, 3
      %p75 = pnand %p73, %p74
      %p76 = pneg %p75
      // Predicated region
      $region9: #{tpu_custom_call.1} parent=5 // pred_check
        _
      $region10: #{tpu_custom_call.1} parent=5 // pred_check_branch
        %78 = sbr.rel (%p75) target = $region12
      $region11: #{tpu_custom_call.1} parent=5 // pred_region
        %s79 = ssub.s32 %s13, 1
      $region12: #{tpu_custom_call.1} parent=5 // pred_fallthru
        _
      %p80 = scmp.lt.s32.totalorder %s13, 2
      // Predicated region
      $region13: #{tpu_custom_call.1} parent=5 // pred_check
        %p81 = pneg %p80
      $region14: #{tpu_custom_call.1} parent=5 // pred_check_branch
        %83 = sbr.rel (%p81) target = $region16
      $region15: #{tpu_custom_call.1} parent=5 // pred_region
        // Predicated region
        $region17: #{tpu_custom_call.1} parent=15 // pred_check
          %p84 = pneg %p33
        $region18: #{tpu_custom_call.1} parent=15 // pred_check_branch
          %86 = sbr.rel (%p84) target = $region20
        $region19: #{tpu_custom_call.1} parent=15 // pred_region
          %s87 = sand.u32 %s23, 1
          %s88 = scalar_lea.sflag [#allocation3], %s87
          %s89 = sand.u32 %s23, 1
          %s90 = smul.addr %s89, 16
          %s91 = scalar_lea.vmem [#allocation2], %s90
          %93 = vsyncadd %s88, 0
          %s94 = smul.addr %s13, 2
          %s95 = smul.addr %s94, 8
          %s96 = scalar_lea.hbm %s0, %s95
          %s98 = sshll.u32 %s96, 4
          %s99 = int_to_ptr.hbm [resolvable:$true] %s98
          %s100 = sshll.u32 %s91, 4
          %s101 = int_to_ptr.vmem [resolvable:$true] %s100
          %103 = dma.hbm_to_vmem [thread:$0]  %s99, 256, %s101, %s88
        $region20: #{tpu_custom_call.1} parent=15 // pred_fallthru
          _
      $region16: #{tpu_custom_call.1} parent=5 // pred_fallthru
        _
      %p104 = scmp.le.s32.totalorder 1, %s13
      %p105 = scmp.lt.s32.totalorder %s13, 3
      %p106 = pnand %p104, %p105
      %p107 = pneg %p106
      // Predicated region
      $region21: #{tpu_custom_call.1} parent=5 // pred_check
        _
      $region22: #{tpu_custom_call.1} parent=5 // pred_check_branch
        %109 = sbr.rel (%p106) target = $region24
      $region23: #{tpu_custom_call.1} parent=5 // pred_region
        %s110 = ssub.s32 %s13, 1
        %s111 = sand.u32 %s26, 1
        %s112 = scalar_lea.sflag [#allocation3], %s111
        %s113 = sand.u32 %s26, 1
        %s114 = smul.addr %s113, 16
        %s115 = scalar_lea.vmem [#allocation2], %s114
        // Predicated region
        $region25: #{tpu_custom_call.1} parent=23 // pred_check
          %p116 = pneg %p39
        $region26: #{tpu_custom_call.1} parent=23 // pred_check_branch
          %118 = sbr.rel (%p116) target = $region28
        $region27: #{tpu_custom_call.1} parent=23 // pred_region
          %120 = dma.done %s112, 256
        $region28: #{tpu_custom_call.1} parent=23 // pred_fallthru
          _
        %s121 = sand.u32 %s26, 1
        %s122 = scalar_lea.sflag [#allocation3], %s121
        %s123 = sand.u32 %s26, 1
        %s124 = smul.addr %s123, 16
        %s125 = scalar_lea.vmem [#allocation2], %s124
        %p126 = pneg %p39
        %p127 = pneg %p36
        %p128 = pneg %p65
        %p129 = pneg %p62
        %s130 = sand.u32 %s52, 1
        %s131 = scalar_lea.sflag [#allocation4], %s130
        %s132 = sand.u32 %s52, 1
        %s133 = smul.addr %s132, 8
        %s134 = scalar_lea.vmem [#allocation5], %s133
        %v135 = vld [vmem:[%s115] sm:$0xff]
        %v136 = vld [vmem:[%s115 + $0x8] sm:$0xff]
        %v137 = vmul.f32 %v136, 0.5
        %v138 = vtanh.pop %v137
        %v139 = vadd.f32 %v138, 1.0
        %v140 = vmul.f32 %v139, 0.5
        %v141 = vtanh.pop %v135
        %v142 = vmul.f32 %v141, %v140
        %143 = vst [vmem:[%s134] sm:$0xff] %v142
        %s144 = sand.u32 %s52, 1
        %s145 = scalar_lea.sflag [#allocation4], %s144
        %s146 = sand.u32 %s52, 1
        %s147 = smul.addr %s146, 8
        %s148 = scalar_lea.vmem [#allocation5], %s147
        // Predicated region
        $region29: #{tpu_custom_call.1} parent=23 // pred_check
          %p149 = pneg %p62
        $region30: #{tpu_custom_call.1} parent=23 // pred_check_branch
          %151 = sbr.rel (%p149) target = $region32
        $region31: #{tpu_custom_call.1} parent=23 // pred_region
          %153 = vsyncadd %s145, 0
          %s154 = smul.addr %s18, 8
          %s155 = scalar_lea.hbm %s1, %s154
          %s157 = sshll.u32 %s148, 4
          %s158 = int_to_ptr.vmem [resolvable:$true] %s157
          %s159 = sshll.u32 %s155, 4
          %s160 = int_to_ptr.hbm [resolvable:$true] %s159
          %162 = dma.vmem_to_hbm [thread:$0]  %s158, 128, %s160, %s145
        $region32: #{tpu_custom_call.1} parent=23 // pred_fallthru
          _
      $region24: #{tpu_custom_call.1} parent=5 // pred_fallthru
        _
      %p163 = scmp.le.s32.totalorder 2, %s13
      // Predicated region
      $region33: #{tpu_custom_call.1} parent=5 // pred_check
        %p164 = pneg %p163
      $region34: #{tpu_custom_call.1} parent=5 // pred_check_branch
        %166 = sbr.rel (%p164) target = $region36
      $region35: #{tpu_custom_call.1} parent=5 // pred_region
        %s167 = ssub.s32 %s13, 2
        // Predicated region
        $region37: #{tpu_custom_call.1} parent=35 // pred_check
          %p168 = pneg %p68
        $region38: #{tpu_custom_call.1} parent=35 // pred_check_branch
          %170 = sbr.rel (%p168) target = $region40
        $region39: #{tpu_custom_call.1} parent=35 // pred_region
          %s171 = sand.u32 %s53, 1
          %s172 = scalar_lea.sflag [#allocation4], %s171
          %s173 = sand.u32 %s53, 1
          %s174 = smul.addr %s173, 8
          %s175 = scalar_lea.vmem [#allocation5], %s174
          %177 = dma.done %s172, 128
        $region40: #{tpu_custom_call.1} parent=35 // pred_fallthru
          _
      $region36: #{tpu_custom_call.1} parent=5 // pred_fallthru
        _
    $region6: #{tpu_custom_call.1} parent=1 // loop_footer
      %s17 = sadd.s32 1, %s13
    $region7: #{tpu_custom_call.1} parent=1 // loop_footer_branch
      %12 = sbr.rel target = $region3
    $region8: #{tpu_custom_call.1} parent=1 // loop_exit
      _
    %178 = vsyncpa [#allocation3], 1
    %s179 = scalar_lea.sflag [#allocation3], 1
    %180 = vsyncpa %s179, 1
    %181 = vsyncpa [#allocation4], 1
    %s182 = scalar_lea.sflag [#allocation4], 1
    %183 = vsyncpa %s182, 1

</llo_original>
